<compile_context>
chip_gen: v7x
topology: tpu7x:2x2x1
jax: 0.10.0
libtpu: 0.0.40
codegen_flags: <defaults>
</compile_context>

<pallas_src>
import functools

import jax
import jax.numpy as jnp
from jax import lax
from jax.experimental import pallas as pl
from jax.experimental.pallas import tpu as pltpu


def _round_up(x, m):
    return ((x + m - 1) // m) * m


def _vmem_capacity_bytes():
    """Physical VMEM per TensorCore, with a conservative fallback."""
    try:
        return int(pltpu.get_tpu_info().vmem_capacity_bytes)
    except Exception:
        return 64 * 1024 * 1024  # v7x per-TC size; safe lower bound.


def _pick_block_rows(n, c, itemsize, vmem_cap):
    """Rows per logits tile, sized by bytes (no fixed row cap)."""
    # 8 MiB logits tiles on 128-MiB-VMEM chips (v5e/v6e), 4 MiB on v7x-class.
    # Double-buffered input + f32 intermediates stay well inside VMEM either way.
    budget = 8 * 1024 * 1024 if vmem_cap >= 96 * 1024 * 1024 else 4 * 1024 * 1024
    tm = budget // max(1, c * itemsize)
    tm = max(8, (tm // 8) * 8)
    return min(tm, _round_up(n, 8))


def _focal_loss_kernel(x_ref, wt_ref, tgt_ref, num_ref, den_ref, *,
                       gamma, n_rows):
    # x_ref:   (TM, C) logits (native dtype)
    # wt_ref:  (TM, 1) f32 per-sample class weight
    # tgt_ref: (TM, 1) int32 class indices
    # num_ref: (1, 8, 128) f32 per-tile partial of sum(w_t * mod)
    # den_ref: (1, 8, 128) f32 per-tile partial of sum(w_t)
    i = pl.program_id(0)

    x = x_ref[...].astype(jnp.float32)        # (TM, C)  cast at load
    w_t = wt_ref[...].astype(jnp.float32)     # (TM, 1)
    tgt = tgt_ref[...]                        # (TM, 1) int32
    tm, c = x.shape

    # Ragged-tail mask: logits are NOT padded in HBM, OOB rows hold garbage.
    row_ids = i * tm + lax.broadcasted_iota(jnp.int32, (tm, 1), 0)
    valid = row_ids < n_rows                                   # (TM, 1)

    # log-softmax pieces: only (TM, 1) reductions are kept around.
    m = jnp.max(x, axis=1, keepdims=True)                      # (TM, 1)
    sumexp = jnp.sum(jnp.exp(x - m), axis=1, keepdims=True)    # (TM, 1)
    lse = jnp.log(sumexp)                                      # (TM, 1)

    # Gather the target logit from raw x (keeps `x - m` fusable into the exp
    # reduction instead of materializing a second full-width temp).
    col_ids = lax.broadcasted_iota(jnp.int32, (tm, c), 1)
    onehot = col_ids == tgt                                    # (TM, C)
    picked_x = jnp.sum(jnp.where(onehot, x, 0.0), axis=1, keepdims=True)

    logpt_t = (picked_x - m) - lse                             # (TM, 1)
    pt_t = jnp.exp(logpt_t)                                    # (TM, 1)
    om = jnp.maximum(1.0 - pt_t, 0.0)       # clamp: no NaN from generic pow

    g = float(gamma)
    if g == 2.0:                            # module default: pow -> multiplies
        mod = om * om * logpt_t
    elif g == 0.0:
        mod = logpt_t
    elif g == int(g) and g > 0:
        mod = (om ** int(g)) * logpt_t      # integer_pow -> repeated multiplies
    else:
        mod = (om ** g) * logpt_t           # generic pow (non-integer gamma)

    # Mask the whole contribution (not just w_t) so garbage tail rows cannot
    # inject NaN/Inf into the partials.
    num_c = jnp.where(valid, w_t * mod, 0.0)                   # (TM, 1)
    den_c = jnp.where(valid, w_t, 0.0)                         # (TM, 1)

    num_p = jnp.sum(num_c, keepdims=True)                      # (1, 1)
    den_p = jnp.sum(den_c, keepdims=True)                      # (1, 1)

    # Lane-dense per-tile partial blocks; wrapper reads [:, 0, 0].
    num_ref[...] = jnp.broadcast_to(num_p, num_ref.shape).astype(jnp.float32)
    den_ref[...] = jnp.broadcast_to(den_p, den_ref.shape).astype(jnp.float32)


def focal_loss(logits, target, weight=None, gamma=2.0, block_rows=None):
    """logits: [N, C] (any float dtype), target: [N] int, weight: optional [C]."""
    n, c = logits.shape
    target = target.astype(jnp.int32)

    # Per-sample weight gather in the wrapper (tiny XLA op) -> (N,) f32.
    if weight is None:
        w_t = jnp.ones((n,), dtype=jnp.float32)
    else:
        w_t = weight.astype(jnp.float32)[target]

    itemsize = jnp.dtype(logits.dtype).itemsize
    vmem_cap = _vmem_capacity_bytes()
    tm = block_rows if block_rows is not None else _pick_block_rows(
        n, c, itemsize, vmem_cap)
    tm = max(8, (int(tm) // 8) * 8)
    num_tiles = pl.cdiv(n, tm)

    tgt2d = target.reshape(n, 1)
    wt2d = w_t.reshape(n, 1)

    # VMEM budget: double-buffered native-dtype logits tile + f32 (TM, C)
    # intermediates + slack; clamped below detected capacity.
    tile_bytes = tm * c * itemsize
    f32_tile = tm * c * 4
    want = 2 * tile_bytes + 3 * f32_tile + (4 * 1024 * 1024)
    vmem_limit = int(max(16 * 1024 * 1024,
                         min(want, vmem_cap - 8 * 1024 * 1024)))

    grid_spec = pltpu.PrefetchScalarGridSpec(
        num_scalar_prefetch=0,
        grid=(num_tiles,),
        in_specs=[
            pl.BlockSpec((tm, c), lambda i: (i, 0)),
            pl.BlockSpec((tm, 1), lambda i: (i, 0)),
            pl.BlockSpec((tm, 1), lambda i: (i, 0)),
        ],
        out_specs=[
            pl.BlockSpec((1, 8, 128), lambda i: (i, 0, 0)),
            pl.BlockSpec((1, 8, 128), lambda i: (i, 0, 0)),
        ],
    )

    num_p, den_p = pl.pallas_call(
        functools.partial(_focal_loss_kernel, gamma=gamma, n_rows=n),
        out_shape=(jax.ShapeDtypeStruct((num_tiles, 8, 128), jnp.float32),
                   jax.ShapeDtypeStruct((num_tiles, 8, 128), jnp.float32)),
        grid_spec=grid_spec,
        compiler_params=pltpu.CompilerParams(
            dimension_semantics=("parallel",),
            vmem_limit_bytes=vmem_limit),
    )(logits, wt2d, tgt2d)

    num = jnp.sum(num_p[:, 0, 0])
    den = jnp.sum(den_p[:, 0, 0])
    # NOTE: den == 0 (all selected weights zero) yields inf/nan, matching
    # PyTorch's weighted-mean nll_loss behaviour.
    return -num / den


def _focal_loss_ref(logits, target, weight=None, gamma=2.0):
    """Pure-JAX reference mirroring the PyTorch module."""
    logpt = jax.nn.log_softmax(logits.astype(jnp.float32), axis=1)
    pt = jnp.exp(logpt)
    mod = ((1.0 - pt) ** gamma) * logpt
    n, c = logits.shape
    if weight is None:
        weight = jnp.ones((c,), dtype=jnp.float32)
    picked = mod[jnp.arange(n), target]
    w_t = weight.astype(jnp.float32)[target]
    return -jnp.sum(w_t * picked) / jnp.sum(w_t)


if __name__ == "__main__":
    key = jax.random.PRNGKey(0)
    k1, k2, k3, k4, k5 = jax.random.split(key, 5)

    N, C = 8, 32
    logits = jax.random.normal(k1, (N, C), dtype=jnp.float32)
    target = jax.random.randint(k2, (N,), 0, C, dtype=jnp.int32)

    # Default module config: gamma=2.0, weight=None.
    loss = jax.block_until_ready(focal_loss(logits, target, weight=None,
                                            gamma=2.0))
    ref = _focal_loss_ref(logits, target, weight=None, gamma=2.0)
    assert jnp.allclose(loss, ref, rtol=1e-5, atol=1e-5), (loss, ref)

    # Weighted variant (exercises the wrapper-side weight gather path).
    weight = jax.random.uniform(k3, (C,), minval=0.5, maxval=1.5,
                                dtype=jnp.float32)
    loss_w = jax.block_until_ready(focal_loss(logits, target, weight=weight,
                                              gamma=2.0))
    ref_w = _focal_loss_ref(logits, target, weight=weight, gamma=2.0)
    assert jnp.allclose(loss_w, ref_w, rtol=1e-5, atol=1e-5), (loss_w, ref_w)

    # Ragged N (in-kernel tail masking, no HBM padding) + multi-tile
    # "parallel" partials path.
    N2, C2 = 21, 16
    logits2 = jax.random.normal(k4, (N2, C2), dtype=jnp.float32)
    target2 = jax.random.randint(k5, (N2,), 0, C2, dtype=jnp.int32)
    loss2 = jax.block_until_ready(
        focal_loss(logits2, target2, weight=weight[:C2], gamma=2.0,
                   block_rows=8))
    ref2 = _focal_loss_ref(logits2, target2, weight=weight[:C2], gamma=2.0)
    assert jnp.allclose(loss2, ref2, rtol=1e-5, atol=1e-5), (loss2, ref2)

    print("KERNEL_OK")
</pallas_src>

<mosaic_0001>
module attributes {stable_mosaic.version = 11 : i64} {
  func.func @_focal_loss_kernel(%arg0: i32, %arg1: memref<8x32xf32, #tpu.memory_space<vmem>>, %arg2: memref<8x1xf32, #tpu.memory_space<vmem>>, %arg3: memref<8x1xi32, #tpu.memory_space<vmem>>, %arg4: memref<1x8x128xf32, #tpu.memory_space<vmem>>, %arg5: memref<1x8x128xf32, #tpu.memory_space<vmem>>) attributes {dimension_semantics = [#tpu.dimension_semantics<parallel>], iteration_bounds = array<i64: 1>, scalar_prefetch = 0 : i64, scratch_operands = 0 : i64, tpu.core_type = #tpu.core_type<tc>, window_params = [{transform_indices = @transform_0, window_bounds = array<i64: 8, 32>}, {transform_indices = @transform_1, window_bounds = array<i64: 8, 1>}, {transform_indices = @transform_2, window_bounds = array<i64: 8, 1>}, {transform_indices = @transform_3, window_bounds = array<i64: 1, 8, 128>}, {transform_indices = @transform_4, window_bounds = array<i64: 1, 8, 128>}]} {
    %c0 = arith.constant 0 : index
    %c0_0 = arith.constant 0 : index
    %0 = vector.load %arg1[%c0, %c0_0] : memref<8x32xf32, #tpu.memory_space<vmem>>, vector<8x32xf32>
    %c0_1 = arith.constant 0 : index
    %c0_2 = arith.constant 0 : index
    %1 = vector.load %arg2[%c0_1, %c0_2] : memref<8x1xf32, #tpu.memory_space<vmem>>, vector<8x1xf32>
    %c0_3 = arith.constant 0 : index
    %c0_4 = arith.constant 0 : index
    %2 = vector.load %arg3[%c0_3, %c0_4] : memref<8x1xi32, #tpu.memory_space<vmem>>, vector<8x1xi32>
    %c8_i32 = arith.constant 8 : i32
    %3 = arith.muli %arg0, %c8_i32 : i32
    %4 = tpu.iota {dimensions = array<i32: 0>} : vector<8x1xi32>
    %5 = vector.broadcast %3 : i32 to vector<8x1xi32>
    %6 = arith.addi %5, %4 : vector<8x1xi32>
    %c8_i32_5 = arith.constant 8 : i32
    %7 = vector.broadcast %c8_i32_5 : i32 to vector<8x1xi32>
    %8 = arith.cmpi slt, %6, %7 : vector<8x1xi32>
    %cst = arith.constant dense<0xFF800000> : vector<8xf32>
    %9 = vector.multi_reduction <maximumf>, %0, %cst [1] : vector<8x32xf32> to vector<8xf32>
    %10 = vector.shape_cast %9 : vector<8xf32> to vector<8x1xf32>
    %11 = vector.broadcast %10 : vector<8x1xf32> to vector<8x32xf32>
    %12 = arith.subf %0, %11 : vector<8x32xf32>
    %13 = math.exp %12 : vector<8x32xf32>
    %cst_6 = arith.constant dense<0.000000e+00> : vector<8xf32>
    %14 = vector.multi_reduction <add>, %13, %cst_6 [1] : vector<8x32xf32> to vector<8xf32>
    %15 = vector.shape_cast %14 : vector<8xf32> to vector<8x1xf32>
    %16 = math.log %15 : vector<8x1xf32>
    %17 = tpu.iota {dimensions = array<i32: 1>} : vector<8x32xi32>
    %18 = vector.broadcast %2 : vector<8x1xi32> to vector<8x32xi32>
    %19 = arith.cmpi eq, %17, %18 : vector<8x32xi32>
    %cst_7 = arith.constant 0.000000e+00 : f32
    %20 = vector.broadcast %cst_7 : f32 to vector<8x32xf32>
    %21 = arith.select %19, %0, %20 : vector<8x32xi1>, vector<8x32xf32>
    %cst_8 = arith.constant dense<0.000000e+00> : vector<8xf32>
    %22 = vector.multi_reduction <add>, %21, %cst_8 [1] : vector<8x32xf32> to vector<8xf32>
    %23 = vector.shape_cast %22 : vector<8xf32> to vector<8x1xf32>
    %24 = arith.subf %23, %10 : vector<8x1xf32>
    %25 = arith.subf %24, %16 : vector<8x1xf32>
    %26 = math.exp %25 : vector<8x1xf32>
    %cst_9 = arith.constant 1.000000e+00 : f32
    %27 = vector.broadcast %cst_9 : f32 to vector<8x1xf32>
    %28 = arith.subf %27, %26 : vector<8x1xf32>
    %cst_10 = arith.constant 0.000000e+00 : f32
    %29 = vector.broadcast %cst_10 : f32 to vector<8x1xf32>
    %30 = arith.maximumf %28, %29 : vector<8x1xf32>
    %31 = arith.mulf %30, %30 : vector<8x1xf32>
    %32 = arith.mulf %31, %25 : vector<8x1xf32>
    %33 = arith.mulf %1, %32 : vector<8x1xf32>
    %cst_11 = arith.constant 0.000000e+00 : f32
    %34 = vector.broadcast %cst_11 : f32 to vector<8x1xf32>
    %35 = arith.select %8, %33, %34 : vector<8x1xi1>, vector<8x1xf32>
    %cst_12 = arith.constant 0.000000e+00 : f32
    %36 = vector.broadcast %cst_12 : f32 to vector<8x1xf32>
    %37 = arith.select %8, %1, %36 : vector<8x1xi1>, vector<8x1xf32>
    %38 = vector.shape_cast %35 : vector<8x1xf32> to vector<1x8x1xf32>
    %cst_13 = arith.constant dense<0.000000e+00> : vector<1xf32>
    %39 = vector.multi_reduction <add>, %38, %cst_13 [1, 2] : vector<1x8x1xf32> to vector<1xf32>
    %40 = vector.shape_cast %39 : vector<1xf32> to vector<1x1x1xf32>
    %41 = vector.extract %40[0, 0, 0] : f32 from vector<1x1x1xf32>
    %42 = vector.broadcast %41 : f32 to vector<1x1xf32>
    %43 = vector.shape_cast %37 : vector<8x1xf32> to vector<1x8x1xf32>
    %cst_14 = arith.constant dense<0.000000e+00> : vector<1xf32>
    %44 = vector.multi_reduction <add>, %43, %cst_14 [1, 2] : vector<1x8x1xf32> to vector<1xf32>
    %45 = vector.shape_cast %44 : vector<1xf32> to vector<1x1x1xf32>
    %46 = vector.extract %45[0, 0, 0] : f32 from vector<1x1x1xf32>
    %47 = vector.broadcast %46 : f32 to vector<1x1xf32>
    %48 = vector.shape_cast %42 : vector<1x1xf32> to vector<1x1x1xf32>
    %49 = vector.broadcast %48 : vector<1x1x1xf32> to vector<1x8x128xf32>
    %c0_15 = arith.constant 0 : index
    %c0_16 = arith.constant 0 : index
    %c0_17 = arith.constant 0 : index
    %50 = vector.load %arg4[%c0_15, %c0_16, %c0_17] : memref<1x8x128xf32, #tpu.memory_space<vmem>>, vector<1x8x128xf32>
    tpu.vector_store %arg4[%c0_15, %c0_16, %c0_17], %49 {strides = array<i32>} : memref<1x8x128xf32, #tpu.memory_space<vmem>>, vector<1x8x128xf32>,
    %51 = vector.shape_cast %47 : vector<1x1xf32> to vector<1x1x1xf32>
    %52 = vector.broadcast %51 : vector<1x1x1xf32> to vector<1x8x128xf32>
    %c0_18 = arith.constant 0 : index
    %c0_19 = arith.constant 0 : index
    %c0_20 = arith.constant 0 : index
    %53 = vector.load %arg5[%c0_18, %c0_19, %c0_20] : memref<1x8x128xf32, #tpu.memory_space<vmem>>, vector<1x8x128xf32>
    tpu.vector_store %arg5[%c0_18, %c0_19, %c0_20], %52 {strides = array<i32>} : memref<1x8x128xf32, #tpu.memory_space<vmem>>, vector<1x8x128xf32>,
    return
  }
  func.func @transform_0(%arg0: i32) -> (i32, i32) {
    %c0_i32 = arith.constant 0 : i32
    %c0_i32_0 = arith.constant 0 : i32
    return %arg0, %c0_i32 : i32, i32
  }
  func.func @transform_1(%arg0: i32) -> (i32, i32) {
    %c0_i32 = arith.constant 0 : i32
    %c0_i32_0 = arith.constant 0 : i32
    return %arg0, %c0_i32 : i32, i32
  }
  func.func @transform_2(%arg0: i32) -> (i32, i32) {
    %c0_i32 = arith.constant 0 : i32
    %c0_i32_0 = arith.constant 0 : i32
    return %arg0, %c0_i32 : i32, i32
  }
  func.func @transform_3(%arg0: i32) -> (i32, i32, i32) {
    %c0_i32 = arith.constant 0 : i32
    %c0_i32_0 = arith.constant 0 : i32
    %c0_i32_1 = arith.constant 0 : i32
    return %arg0, %c0_i32, %c0_i32_0 : i32, i32, i32
  }
  func.func @transform_4(%arg0: i32) -> (i32, i32, i32) {
    %c0_i32 = arith.constant 0 : i32
    %c0_i32_0 = arith.constant 0 : i32
    %c0_i32_1 = arith.constant 0 : i32
    return %arg0, %c0_i32, %c0_i32_0 : i32, i32, i32
  }
}

</mosaic_0001>

<llo_original>
// kernel: tpu_custom_call.1
$region0: #{tpu_custom_call.1}
  #allocation0 [shape = 'u32[]', space=smem, size = 0x4, offset = 0x4, fixed_abs, tag = 'smem constant byte address 0x4 - core index']
  #allocation1 [shape = 'u32[144,128]{1,0:T(1,128)}', space=vmem, size = 0x12000, scoped, tag = 'internal scratch']
  %s0 = inlined_call_operand.vmem [shape: f32[8,32], index: 0, kind: input, shape index: {}]
  %s1 = inlined_call_operand.vmem [shape: f32[8,1], index: 1, kind: input, shape index: {}]
  %s2 = inlined_call_operand.vmem [shape: s32[8,1], index: 2, kind: input, shape index: {}]
  %s3 = inlined_call_operand.hbm [shape: f32[1,8,128], index: 3, kind: output, shape index: {0}]
  %s4 = inlined_call_operand.hbm [shape: f32[1,8,128], index: 4, kind: output, shape index: {1}]
  %5 = xla_tuple %s3, %s4
  %s6 = sld [smem:[#allocation0]]
  $region30: #{tpu_custom_call.1} parent=0
    _
  %s8 = ssub.s32 1, %s6
  %s9 = scalar_select 0, %s8, %s6
  $region1: #{tpu_custom_call.1} parent=0
    #allocation2 [shape = 'u8[4096]{0}', space=vmem, size = 0x1000, scoped, tag = 'output window, operand 0, single buffered']
    #allocation3 [shape = 's32[1]{0}', space=sflag, size = 0x4, scoped, tag = 'scoped memory for tpu_custom_call.1']
    #allocation4 [shape = 'u8[4096]{0}', space=vmem, size = 0x1000, scoped, tag = 'output window, operand 1, single buffered']
    #allocation5 [shape = 's32[1]{0}', space=sflag, size = 0x4, scoped, tag = 'scoped memory for tpu_custom_call.1']
    %10 = vsyncpa [#allocation3], 0
    %11 = vsyncpa [#allocation5], 0
    // Predicated region
    $region2: #{tpu_custom_call.1} parent=1 // pred_check
      _
    $region3: #{tpu_custom_call.1} parent=1 // pred_check_branch
      %13 = sbr.rel (0) target = $region5
    $region4: #{tpu_custom_call.1} parent=1 // pred_region
      _
    $region5: #{tpu_custom_call.1} parent=1 // pred_fallthru
      _
    // Predicated region
    $region6: #{tpu_custom_call.1} parent=1 // pred_check
      _
    $region7: #{tpu_custom_call.1} parent=1 // pred_check_branch
      %15 = sbr.rel (0) target = $region9
    $region8: #{tpu_custom_call.1} parent=1 // pred_region
      _
    $region9: #{tpu_custom_call.1} parent=1 // pred_fallthru
      _
    // Predicated region
    $region10: #{tpu_custom_call.1} parent=1 // pred_check
      _
    $region11: #{tpu_custom_call.1} parent=1 // pred_check_branch
      %17 = sbr.rel (0) target = $region13
    $region12: #{tpu_custom_call.1} parent=1 // pred_region
      _
    $region13: #{tpu_custom_call.1} parent=1 // pred_fallthru
      _
    %v18 = vld [vmem:[%s0] sm:$0xff]
    %v19 = vld [vmem:[%s1] sm:$0xff]
    %v20 = vld [vmem:[%s2] sm:$0xff]
    %s21 = smul.u32 0, 8
    %v22 = vlaneseq
    %v23 = vshrl.u32 %v22, 7
    %v24 = vstv %s21
    %v25 = vadd.s32 %v24, %v23
    %vm26 = vcmp.lt.s32.totalorder %v25, 8
    %vm27 = vcmask 261120
    %v28 = vsel %vm27, %v18, -inf
    %29 = vmax.xlane.f32.xlu0 %v28
    %v30 = vpop.xlane.xlu0 %29
    %v31 = vsub.f32 %v18, %v30
    %v32 = vmul.f32 %v31, 1.442695
    %v33 = vpow.pop %v32
    %v34 = vsel %vm27, %v33, 0.0
    %35 = vadd.xlane.f32.xlu0 %v34
    %v36 = vpop.xlane.xlu0 %35
    %v37 = vlog2.pop %v36
    %v38 = vmul.f32 %v37, 0.6931472
    %v39 = vlaneseq
    %v40 = vand.u32 %v39, 127
    %41 = vset.pattern.permute.xlu0 0
    %42 = vperm.xlu0 %41, %v20
    %v43 = vpop.permute.xlu0 %42
    %vm44 = vcmp.eq.s32.totalorder %v40, %v43
    %v45 = vsel %vm44, %v18, 0.0
    %v46 = vsel %vm27, %v45, 0.0
    %47 = vadd.xlane.f32.xlu0 %v46
    %v48 = vpop.xlane.xlu0 %47
    %v49 = vsub.f32 %v48, %v30
    %v50 = vsub.f32 %v49, %v38
    %v51 = vmul.f32 %v50, 1.442695
    %v52 = vpow.pop %v51
    %v53 = vsub.f32 1.0, %v52
    %v54 = vmax.f32 %v53, 0.0
    %v55 = vmul.f32 %v54, %v54
    %v56 = vmul.f32 %v55, %v50
    %v57 = vmul.f32 %v19, %v56
    %v58 = vsel %vm26, %v57, 0.0
    %v59 = vsel %vm26, %v19, 0.0
    %vm60 = vcmask 7168
    %v61 = vsel %vm60, %v58, 0.0
    %62 = vadd.xlane.f32.xlu0 %v61
    %v63 = vpop.xlane.xlu0 %62
    %v64 = vrot.slane %v63, 4
    %v65 = vadd.f32 %v63, %v64
    %v66 = vrot.slane %v65, 2
    %v67 = vadd.f32 %v65, %v66
    %v68 = vrot.slane %v67, 1
    %v69 = vadd.f32 %v67, %v68
    %s70 = vtos %v69
    %v71 = vsel %vm60, %v59, 0.0
    %72 = vadd.xlane.f32.xlu0 %v71
    %v73 = vpop.xlane.xlu0 %72
    %v74 = vrot.slane %v73, 4
    %v75 = vadd.f32 %v73, %v74
    %v76 = vrot.slane %v75, 2
    %v77 = vadd.f32 %v75, %v76
    %v78 = vrot.slane %v77, 1
    %v79 = vadd.f32 %v77, %v78
    %s80 = vtos %v79
    %v81 = vstv %s70
    %82 = vst [vmem:[#allocation2] sm:$0xff] %v81
    %v83 = vstv %s80
    %84 = vst [vmem:[#allocation4] sm:$0xff] %v83
    // Predicated region
    $region14: #{tpu_custom_call.1} parent=1 // pred_check
      _
    $region15: #{tpu_custom_call.1} parent=1 // pred_check_branch
      %86 = sbr.rel (0) target = $region17
    $region16: #{tpu_custom_call.1} parent=1 // pred_region
      %s88 = ssub.s32 128, 128
      %89 = vsyncadd [#allocation3], %s88
      %s91 = sshll.u32 [#allocation2], 4
      %s92 = int_to_ptr.vmem [resolvable:$true] %s91
      %94 = dma.vmem_to_hbm [thread:$0]  %s92, 128, %s3, [#allocation3]
    $region17: #{tpu_custom_call.1} parent=1 // pred_fallthru
      _
    // Predicated region
    $region18: #{tpu_custom_call.1} parent=1 // pred_check
      _
    $region19: #{tpu_custom_call.1} parent=1 // pred_check_branch
      %96 = sbr.rel (0) target = $region21
    $region20: #{tpu_custom_call.1} parent=1 // pred_region
      %s98 = ssub.s32 128, 128
      %99 = vsyncadd [#allocation5], %s98
      %s101 = sshll.u32 [#allocation4], 4
      %s102 = int_to_ptr.vmem [resolvable:$true] %s101
      %104 = dma.vmem_to_hbm [thread:$0]  %s102, 128, %s4, [#allocation5]
    $region21: #{tpu_custom_call.1} parent=1 // pred_fallthru
      _
    // Predicated region
    $region22: #{tpu_custom_call.1} parent=1 // pred_check
      _
    $region23: #{tpu_custom_call.1} parent=1 // pred_check_branch
      %106 = sbr.rel (0) target = $region25
    $region24: #{tpu_custom_call.1} parent=1 // pred_region
      %107 = dma.done [#allocation3], 128
    $region25: #{tpu_custom_call.1} parent=1 // pred_fallthru
      _
    // Predicated region
    $region26: #{tpu_custom_call.1} parent=1 // pred_check
      _
    $region27: #{tpu_custom_call.1} parent=1 // pred_check_branch
      %109 = sbr.rel (0) target = $region29
    $region28: #{tpu_custom_call.1} parent=1 // pred_region
      %110 = dma.done [#allocation5], 128
    $region29: #{tpu_custom_call.1} parent=1 // pred_fallthru
      _
    %111 = vsyncpa [#allocation3], 1
    %112 = vsyncpa [#allocation5], 1

</llo_original>
